<compile_context>
chip_gen: v5e
topology: v5e:2x2
jax: 0.10.0
libtpu: 0.0.40
codegen_flags: <defaults>
</compile_context>

<pallas_src>
import functools

import jax
import jax.numpy as jnp
import numpy as np
from jax.experimental import pallas as pl
from jax.experimental.pallas import tpu as pltpu

_K = 31        # conv kernel size
_PAD = 15      # conv padding
_PADL = 128    # left border columns (interior start, lane-aligned)
_PADR = 128    # right border columns
_NCHUNK = 512  # lane-chunk width for the dot + epilogue streaming
_ACT_DTYPE = jnp.bfloat16


def _n_taps(p):
    """Number of tap-stacked row groups for a layer whose input has p phases."""
    return p + 2 * _PAD - 1


# ----------------------------- Pallas kernel --------------------------------

def _stack_taps(src_ref, stk_ref, *, cin, p, src_col0, lpa):
    """Build the tap-stacked matmul RHS for one conv layer.

    src_ref holds the layer input in phase-major layout: phase r occupies sublanes
    [r*cin, (r+1)*cin), interior columns [src_col0, src_col0+lpa).  Stacked row
    group idx holds source phase r shifted by d lanes, where
    (d, r) = divmod(idx - 15, p).  Consecutive idx with the same d are contiguous
    in both source and destination, so the copies are grouped by lane shift d
    (9 copies for conv2, 16 for conv3) instead of one copy per tap.
    """
    n_t = _n_taps(p)
    idx = 0
    while idx < n_t:
        d, r = divmod(idx - _PAD, p)
        cnt = 1
        while idx + cnt < n_t and (idx + cnt - _PAD) // p == d:
            cnt += 1
        stk_ref[pl.ds(idx * cin, cnt * cin), :] = src_ref[
            pl.ds(r * cin, cnt * cin), pl.ds(src_col0 + d, lpa)]
        idx += cnt
    return n_t * cin


def _dot_bn_relu(rhs_fn, w, shift, *, lp, lpa, dst_ref=None, dst_col0=None):
    """Chunked (over lanes) MXU dot + BN shift + ReLU epilogue.

    Either stores bf16 activations into dst_ref's interior, or (dst_ref is None)
    returns the per-channel sum over the true length lp for the average pool.
    The lane-padding tail [lp, lpa) is masked to zero so it cannot leak into the
    next layer's taps or the pool.
    """
    pooled = None
    for c0 in range(0, lpa, _NCHUNK):
        cw = min(_NCHUNK, lpa - c0)
        y = jnp.dot(w, rhs_fn(c0, cw), preferred_element_type=jnp.float32)
        y = jnp.maximum(y + shift, 0.0)
        if c0 + cw > lp:  # static: this chunk contains lane-padding columns
            col = jax.lax.broadcasted_iota(jnp.int32, y.shape, 1) + c0
            y = jnp.where(col < lp, y, 0.0)
        if dst_ref is None:
            part = jnp.sum(y, axis=1, keepdims=True)
            pooled = part if pooled is None else pooled + part
        else:
            dst_ref[:, pl.ds(dst_col0 + c0, cw)] = y.astype(dst_ref.dtype)
    return pooled


def _fused_kernel(lp, lpa,
                  x_ref, w1_ref, s1_ref, w2_ref, s2_ref, w3_ref, s3_ref,
                  fcw_ref, fcb_ref, o_ref, a1_ref, a2_ref, stk_ref):
    # Zero only the border columns the shifted tap loads can touch (<= 8 per side).
    for ref in (a1_ref, a2_ref):
        ref[:, pl.ds(_PADL - 8, 8)] = jnp.zeros((64, 8), ref.dtype)
        ref[:, pl.ds(_PADL + lpa, 8)] = jnp.zeros((64, 8), ref.dtype)

    # conv1 + bn1 + relu: 1 -> 16 ch, 8 -> 4 phases.  The tap-stacked RHS (37, lpa)
    # comes pre-built from the wrapper (Cin == 1), so this is a single stacked dot.
    _dot_bn_relu(lambda c0, cw: x_ref[:, pl.ds(c0, cw)],
                 w1_ref[...], s1_ref[...], lp=lp, lpa=lpa,
                 dst_ref=a1_ref, dst_col0=_PADL)

    # conv2 + bn2 + relu: 16 -> 32 ch, 4 -> 2 phases (contraction K = 33*16 = 528).
    rows2 = _stack_taps(a1_ref, stk_ref, cin=16, p=4, src_col0=_PADL, lpa=lpa)
    _dot_bn_relu(lambda c0, cw: stk_ref[pl.ds(0, rows2), pl.ds(c0, cw)],
                 w2_ref[...], s2_ref[...], lp=lp, lpa=lpa,
                 dst_ref=a2_ref, dst_col0=_PADL)

    # conv3 + bn3 + relu: 32 -> 64 ch, 2 -> 1 phase (K = 31*32 = 992), streamed
    # straight into the global-average-pool accumulator (no (64, lp) f32 value).
    rows3 = _stack_taps(a2_ref, stk_ref, cin=32, p=2, src_col0=_PADL, lpa=lpa)
    pooled = _dot_bn_relu(lambda c0, cw: stk_ref[pl.ds(0, rows3), pl.ds(c0, cw)],
                          w3_ref[...], s3_ref[...], lp=lp, lpa=lpa)

    # Global average pool (true length lp) + Linear(64 -> 1).
    mean = pooled * (1.0 / lp)                                        # (64, 1) f32
    o_ref[0] = jnp.sum(mean * fcw_ref[...], axis=0, keepdims=True) + fcb_ref[...]


# ------------------------------ JAX wrapper ----------------------------------

def _stack_weights(w_eff, shift, p):
    """Tap-stack BN-folded conv weights for the polyphase layer with p input phases.

    Returns W of shape (p//2 * cout, n_taps * cin): output phase q, channel co reads
    stacked row group idx with weight w_eff[co, :, idx - 2q] (zero outside the 31
    taps), plus the matching per-row BN/bias shift of shape (p//2 * cout, 1).
    """
    cout, cin, _ = w_eff.shape
    n_t = _n_taps(p)
    zero = jnp.zeros((cout, cin), w_eff.dtype)
    rows = []
    for q in range(p // 2):
        cols = [w_eff[:, :, idx - 2 * q] if 0 <= idx - 2 * q < _K else zero
                for idx in range(n_t)]
        rows.append(jnp.concatenate(cols, axis=1))
    W = jnp.concatenate(rows, axis=0)                       # (p//2*cout, n_t*cin)
    S = jnp.tile(shift, p // 2)[:, None]                    # (p//2*cout, 1)
    return W, S


def broadcast_classifier_forward(x, params, *, eps=1e-5, interpret=False):
    """x: (B, 1, L) or (B, L) float32 waveform.  Returns (B, 1) logits."""
    if x.ndim == 3:
        x = x[:, 0, :]
    assert x.ndim == 2, x.shape
    B, L = x.shape
    assert L % 8 == 0, "window_len must be a multiple of 8"
    lp = L // 8                               # true per-phase length (= conv3 length)
    lpa = ((lp + 127) // 128) * 128           # lane-aligned per-phase length

    # Fold eval-mode BatchNorm (+ conv bias) into the weights / a per-channel shift,
    # tap-stack the weights, and cast matmul operands to bf16 (f32 accumulation).
    folded = []
    for li, p in ((1, 8), (2, 4), (3, 2)):
        w = params[f"conv{li}_w"].astype(jnp.float32)              # (Cout, Cin, 31)
        b = params[f"conv{li}_b"].astype(jnp.float32)
        scale = params[f"bn{li}_gamma"] / jnp.sqrt(params[f"bn{li}_var"] + eps)
        w_eff = w * scale[:, None, None]
        shift = (b - params[f"bn{li}_mean"]) * scale + params[f"bn{li}_beta"]
        W, S = _stack_weights(w_eff, shift, p)
        folded += [W.astype(_ACT_DTYPE), S.astype(jnp.float32)]
    w1, s1, w2, s2, w3, s3 = folded
    fcw = params["fc_w"].astype(jnp.float32).reshape(64, 1)        # torch (1, 64)
    fcb = params["fc_b"].astype(jnp.float32).reshape(1, 1)

    # conv1's tap-stacked RHS, built from the raw waveform with strided slices:
    # row (t + 15) holds x[8m + t] (conv zero-padded), m in [0, lpa).
    xp = jnp.pad(x.astype(jnp.float32), ((0, 0), (_PAD, 8 * lpa - L + _PAD + 7)))
    x_stk = jnp.stack(
        [xp[:, _PAD + t: _PAD + t + 8 * lpa: 8] for t in range(-_PAD, _PAD + 7)],
        axis=1).astype(_ACT_DTYPE)                                  # (B, 37, lpa)

    n_t1 = _n_taps(8)
    width = _PADL + lpa + _PADR
    kernel = functools.partial(_fused_kernel, lp, lpa)

    out = pl.pallas_call(
        kernel,
        out_shape=jax.ShapeDtypeStruct((B, 1, 1), jnp.float32),
        grid=(B,),
        in_specs=[
            pl.BlockSpec((None, n_t1, lpa), lambda b: (b, 0, 0)),     # conv1 stacked RHS
            pl.BlockSpec((64, n_t1), lambda b: (0, 0)),               # conv1 stacked W
            pl.BlockSpec((64, 1), lambda b: (0, 0)),                  # conv1 shift
            pl.BlockSpec((64, _n_taps(4) * 16), lambda b: (0, 0)),    # conv2 stacked W
            pl.BlockSpec((64, 1), lambda b: (0, 0)),                  # conv2 shift
            pl.BlockSpec((64, _n_taps(2) * 32), lambda b: (0, 0)),    # conv3 stacked W
            pl.BlockSpec((64, 1), lambda b: (0, 0)),                  # conv3 shift
            pl.BlockSpec((64, 1), lambda b: (0, 0)),                  # fc weight (T)
            pl.BlockSpec((1, 1), lambda b: (0, 0)),                   # fc bias
        ],
        out_specs=pl.BlockSpec((1, 1, 1), lambda b: (b, 0, 0)),
        scratch_shapes=[
            pltpu.VMEM((64, width), _ACT_DTYPE),              # conv1 out: 4 ph x 16 ch
            pltpu.VMEM((64, width), _ACT_DTYPE),              # conv2 out: 2 ph x 32 ch
            pltpu.VMEM((_n_taps(2) * 32, lpa), _ACT_DTYPE),   # shared tap-stacked RHS
        ],
        compiler_params=pltpu.CompilerParams(dimension_semantics=("parallel",)),
        interpret=interpret,
    )(x_stk, w1, s1, w2, s2, w3, s3, fcw, fcb)
    return out.reshape(B, 1)


# ---------------------------- parameters & reference -------------------------

def init_params(key):
    params = {}
    dims = [(1, 16), (16, 32), (32, 64)]
    keys = jax.random.split(key, 8)
    ki = 0
    for li, (cin, cout) in enumerate(dims, start=1):
        bound = 1.0 / float(np.sqrt(cin * _K))
        params[f"conv{li}_w"] = jax.random.uniform(
            keys[ki], (cout, cin, _K), jnp.float32, -bound, bound); ki += 1
        params[f"conv{li}_b"] = jax.random.uniform(
            keys[ki], (cout,), jnp.float32, -bound, bound); ki += 1
        # BatchNorm1d defaults (eval mode).
        params[f"bn{li}_gamma"] = jnp.ones((cout,), jnp.float32)
        params[f"bn{li}_beta"] = jnp.zeros((cout,), jnp.float32)
        params[f"bn{li}_mean"] = jnp.zeros((cout,), jnp.float32)
        params[f"bn{li}_var"] = jnp.ones((cout,), jnp.float32)
    bound = 1.0 / float(np.sqrt(64.0))
    params["fc_w"] = jax.random.uniform(
        keys[ki], (1, 64), jnp.float32, -bound, bound); ki += 1
    params["fc_b"] = jax.random.uniform(keys[ki], (1,), jnp.float32, -bound, bound)
    return params


def reference_forward(x, params, *, eps=1e-5):
    """Pure-JAX/XLA reference identical to the PyTorch module in eval mode."""
    if x.ndim == 2:
        x = x[:, None, :]
    y = x.astype(jnp.float32)
    for li in (1, 2, 3):
        w = params[f"conv{li}_w"]
        b = params[f"conv{li}_b"]
        y = jax.lax.conv_general_dilated(
            y, w, window_strides=(2,), padding=[(_PAD, _PAD)],
            dimension_numbers=("NCH", "OIH", "NCH"),
            precision=jax.lax.Precision.HIGHEST,
        ) + b[None, :, None]
        s = (params[f"bn{li}_gamma"] / jnp.sqrt(params[f"bn{li}_var"] + eps))
        y = (y - params[f"bn{li}_mean"][None, :, None]) * s[None, :, None]
        y = jnp.maximum(y + params[f"bn{li}_beta"][None, :, None], 0.0)
    pooled = jnp.mean(y, axis=2)                                  # (B, 64)
    return jnp.sum(pooled * params["fc_w"], axis=1, keepdims=True) + params["fc_b"][None, :]


# ---------------------------------- main --------------------------------------

if __name__ == "__main__":
    key = jax.random.PRNGKey(0)
    k_param, k_x = jax.random.split(key)

    B, window_len = 2, 256  # small synthetic window (real module uses 16000)
    x = jax.random.normal(k_x, (B, 1, window_len), jnp.float32)
    params = init_params(k_param)

    fwd = jax.jit(broadcast_classifier_forward)
    logits = fwd(x, params)
    jax.block_until_ready(logits)
    assert logits.shape == (B, 1) and logits.dtype == jnp.float32

    ref = reference_forward(x, params)
    # bf16 MXU operands (f32 accumulation) vs. the f32 HIGHEST-precision reference.
    np.testing.assert_allclose(np.asarray(logits), np.asarray(ref),
                               rtol=2e-2, atol=2e-2)

    print("KERNEL_OK")
</pallas_src>

<mosaic_0001>
module attributes {stable_mosaic.version = 11 : i64} {
  func.func @_fused_kernel(%arg0: i32, %arg1: memref<1x37x128xbf16, #tpu.memory_space<vmem>>, %arg2: memref<64x37xbf16, #tpu.memory_space<vmem>>, %arg3: memref<64x1xf32, #tpu.memory_space<vmem>>, %arg4: memref<64x528xbf16, #tpu.memory_space<vmem>>, %arg5: memref<64x1xf32, #tpu.memory_space<vmem>>, %arg6: memref<64x992xbf16, #tpu.memory_space<vmem>>, %arg7: memref<64x1xf32, #tpu.memory_space<vmem>>, %arg8: memref<64x1xf32, #tpu.memory_space<vmem>>, %arg9: memref<1x1xf32, #tpu.memory_space<vmem>>, %arg10: memref<1x1x1xf32, #tpu.memory_space<vmem>>, %arg11: memref<64x384xbf16, #tpu.memory_space<vmem>>, %arg12: memref<64x384xbf16, #tpu.memory_space<vmem>>, %arg13: memref<992x128xbf16, #tpu.memory_space<vmem>>) attributes {dimension_semantics = [#tpu.dimension_semantics<parallel>], iteration_bounds = array<i64: 2>, scalar_prefetch = 0 : i64, scratch_operands = 3 : i64, tpu.core_type = #tpu.core_type<tc>, window_params = [{transform_indices = @transform_0, window_bounds = array<i64: 1, 37, 128>}, {pipeline_mode = #tpu.pipeline_mode<synchronous>, transform_indices = @transform_1, window_bounds = array<i64: 64, 37>}, {pipeline_mode = #tpu.pipeline_mode<synchronous>, transform_indices = @transform_2, window_bounds = array<i64: 64, 1>}, {pipeline_mode = #tpu.pipeline_mode<synchronous>, transform_indices = @transform_3, window_bounds = array<i64: 64, 528>}, {pipeline_mode = #tpu.pipeline_mode<synchronous>, transform_indices = @transform_4, window_bounds = array<i64: 64, 1>}, {pipeline_mode = #tpu.pipeline_mode<synchronous>, transform_indices = @transform_5, window_bounds = array<i64: 64, 992>}, {pipeline_mode = #tpu.pipeline_mode<synchronous>, transform_indices = @transform_6, window_bounds = array<i64: 64, 1>}, {pipeline_mode = #tpu.pipeline_mode<synchronous>, transform_indices = @transform_7, window_bounds = array<i64: 64, 1>}, {pipeline_mode = #tpu.pipeline_mode<synchronous>, transform_indices = @transform_8, window_bounds = array<i64: 1, 1>}, {transform_indices = @transform_9, window_bounds = array<i64: 1, 1, 1>}]} {
    %cst = arith.constant 0.000000e+00 : bf16
    %0 = vector.broadcast %cst : bf16 to vector<64x8xbf16>
    %c0 = arith.constant 0 : index
    %c120 = arith.constant 120 : index
    %1 = vector.load %arg11[%c0, %c120] : memref<64x384xbf16, #tpu.memory_space<vmem>>, vector<64x8xbf16>
    tpu.vector_store %arg11[%c0, %c120], %0 {strides = array<i32>} : memref<64x384xbf16, #tpu.memory_space<vmem>>, vector<64x8xbf16>,
    %cst_0 = arith.constant 0.000000e+00 : bf16
    %2 = vector.broadcast %cst_0 : bf16 to vector<64x8xbf16>
    %c0_1 = arith.constant 0 : index
    %c256 = arith.constant 256 : index
    %3 = vector.load %arg11[%c0_1, %c256] : memref<64x384xbf16, #tpu.memory_space<vmem>>, vector<64x8xbf16>
    tpu.vector_store %arg11[%c0_1, %c256], %2 {strides = array<i32>} : memref<64x384xbf16, #tpu.memory_space<vmem>>, vector<64x8xbf16>,
    %cst_2 = arith.constant 0.000000e+00 : bf16
    %4 = vector.broadcast %cst_2 : bf16 to vector<64x8xbf16>
    %c0_3 = arith.constant 0 : index
    %c120_4 = arith.constant 120 : index
    %5 = vector.load %arg12[%c0_3, %c120_4] : memref<64x384xbf16, #tpu.memory_space<vmem>>, vector<64x8xbf16>
    tpu.vector_store %arg12[%c0_3, %c120_4], %4 {strides = array<i32>} : memref<64x384xbf16, #tpu.memory_space<vmem>>, vector<64x8xbf16>,
    %cst_5 = arith.constant 0.000000e+00 : bf16
    %6 = vector.broadcast %cst_5 : bf16 to vector<64x8xbf16>
    %c0_6 = arith.constant 0 : index
    %c256_7 = arith.constant 256 : index
    %7 = vector.load %arg12[%c0_6, %c256_7] : memref<64x384xbf16, #tpu.memory_space<vmem>>, vector<64x8xbf16>
    tpu.vector_store %arg12[%c0_6, %c256_7], %6 {strides = array<i32>} : memref<64x384xbf16, #tpu.memory_space<vmem>>, vector<64x8xbf16>,
    %c0_8 = arith.constant 0 : index
    %c0_9 = arith.constant 0 : index
    %8 = vector.load %arg2[%c0_8, %c0_9] : memref<64x37xbf16, #tpu.memory_space<vmem>>, vector<64x37xbf16>
    %c0_10 = arith.constant 0 : index
    %c0_11 = arith.constant 0 : index
    %9 = vector.load %arg3[%c0_10, %c0_11] : memref<64x1xf32, #tpu.memory_space<vmem>>, vector<64x1xf32>
    %c0_12 = arith.constant 0 : index
    %c0_13 = arith.constant 0 : index
    %c0_14 = arith.constant 0 : index
    %10 = vector.load %arg1[%c0_12, %c0_13, %c0_14] : memref<1x37x128xbf16, #tpu.memory_space<vmem>>, vector<1x37x128xbf16>
    %11 = vector.shape_cast %10 : vector<1x37x128xbf16> to vector<37x128xbf16>
    %cst_15 = arith.constant dense<0.000000e+00> : vector<64x128xf32>
    %12 = tpu.matmul %8, %11, %cst_15 {dimension_numbers = #tpu.dot_dimension_numbers<[1], [0], [0], [1], [0, 0, 1, 1], [], []>} : vector<64x37xbf16>, vector<37x128xbf16>, vector<64x128xf32> -> vector<64x128xf32>
    %13 = vector.broadcast %9 : vector<64x1xf32> to vector<64x128xf32>
    %14 = arith.addf %12, %13 : vector<64x128xf32>
    %cst_16 = arith.constant 0.000000e+00 : f32
    %15 = vector.broadcast %cst_16 : f32 to vector<64x128xf32>
    %16 = arith.maximumf %14, %15 : vector<64x128xf32>
    %17 = tpu.iota {dimensions = array<i32: 1>} : vector<64x128xi32>
    %c0_i32 = arith.constant 0 : i32
    %18 = vector.broadcast %c0_i32 : i32 to vector<64x128xi32>
    %19 = arith.addi %17, %18 : vector<64x128xi32>
    %c32_i32 = arith.constant 32 : i32
    %20 = vector.broadcast %c32_i32 : i32 to vector<64x128xi32>
    %21 = arith.cmpi slt, %19, %20 : vector<64x128xi32>
    %cst_17 = arith.constant 0.000000e+00 : f32
    %22 = vector.broadcast %cst_17 : f32 to vector<64x128xf32>
    %23 = arith.select %21, %16, %22 : vector<64x128xi1>, vector<64x128xf32>
    %24 = arith.truncf %23 : vector<64x128xf32> to vector<64x128xbf16>
    %c0_18 = arith.constant 0 : index
    %c128 = arith.constant 128 : index
    %25 = vector.load %arg11[%c0_18, %c128] : memref<64x384xbf16, #tpu.memory_space<vmem>>, vector<64x128xbf16>
    tpu.vector_store %arg11[%c0_18, %c128], %24 {strides = array<i32>} : memref<64x384xbf16, #tpu.memory_space<vmem>>, vector<64x128xbf16>,
    %c16 = arith.constant 16 : index
    %c124 = arith.constant 124 : index
    %26 = vector.load %arg11[%c16, %c124] : memref<64x384xbf16, #tpu.memory_space<vmem>>, vector<48x128xbf16>
    %c0_19 = arith.constant 0 : index
    %c0_20 = arith.constant 0 : index
    %27 = vector.load %arg13[%c0_19, %c0_20] : memref<992x128xbf16, #tpu.memory_space<vmem>>, vector<48x128xbf16>
    tpu.vector_store %arg13[%c0_19, %c0_20], %26 {strides = array<i32>} : memref<992x128xbf16, #tpu.memory_space<vmem>>, vector<48x128xbf16>,
    %c0_21 = arith.constant 0 : index
    %c125 = arith.constant 125 : index
    %28 = vector.load %arg11[%c0_21, %c125] : memref<64x384xbf16, #tpu.memory_space<vmem>>, vector<64x128xbf16>
    %c48 = arith.constant 48 : index
    %c0_22 = arith.constant 0 : index
    %29 = vector.load %arg13[%c48, %c0_22] : memref<992x128xbf16, #tpu.memory_space<vmem>>, vector<64x128xbf16>
    tpu.vector_store %arg13[%c48, %c0_22], %28 {strides = array<i32>} : memref<992x128xbf16, #tpu.memory_space<vmem>>, vector<64x128xbf16>,
    %c0_23 = arith.constant 0 : index
    %c126 = arith.constant 126 : index
    %30 = vector.load %arg11[%c0_23, %c126] : memref<64x384xbf16, #tpu.memory_space<vmem>>, vector<64x128xbf16>
    %c112 = arith.constant 112 : index
    %c0_24 = arith.constant 0 : index
    %31 = vector.load %arg13[%c112, %c0_24] : memref<992x128xbf16, #tpu.memory_space<vmem>>, vector<64x128xbf16>
    tpu.vector_store %arg13[%c112, %c0_24], %30 {strides = array<i32>} : memref<992x128xbf16, #tpu.memory_space<vmem>>, vector<64x128xbf16>,
    %c0_25 = arith.constant 0 : index
    %c127 = arith.constant 127 : index
    %32 = vector.load %arg11[%c0_25, %c127] : memref<64x384xbf16, #tpu.memory_space<vmem>>, vector<64x128xbf16>
    %c176 = arith.constant 176 : index
    %c0_26 = arith.constant 0 : index
    %33 = vector.load %arg13[%c176, %c0_26] : memref<992x128xbf16, #tpu.memory_space<vmem>>, vector<64x128xbf16>
    tpu.vector_store %arg13[%c176, %c0_26], %32 {strides = array<i32>} : memref<992x128xbf16, #tpu.memory_space<vmem>>, vector<64x128xbf16>,
    %c0_27 = arith.constant 0 : index
    %c128_28 = arith.constant 128 : index
    %34 = vector.load %arg11[%c0_27, %c128_28] : memref<64x384xbf16, #tpu.memory_space<vmem>>, vector<64x128xbf16>
    %c240 = arith.constant 240 : index
    %c0_29 = arith.constant 0 : index
    %35 = vector.load %arg13[%c240, %c0_29] : memref<992x128xbf16, #tpu.memory_space<vmem>>, vector<64x128xbf16>
    tpu.vector_store %arg13[%c240, %c0_29], %34 {strides = array<i32>} : memref<992x128xbf16, #tpu.memory_space<vmem>>, vector<64x128xbf16>,
    %c0_30 = arith.constant 0 : index
    %c129 = arith.constant 129 : index
    %36 = vector.load %arg11[%c0_30, %c129] : memref<64x384xbf16, #tpu.memory_space<vmem>>, vector<64x128xbf16>
    %c304 = arith.constant 304 : index
    %c0_31 = arith.constant 0 : index
    %37 = vector.load %arg13[%c304, %c0_31] : memref<992x128xbf16, #tpu.memory_space<vmem>>, vector<64x128xbf16>
    tpu.vector_store %arg13[%c304, %c0_31], %36 {strides = array<i32>} : memref<992x128xbf16, #tpu.memory_space<vmem>>, vector<64x128xbf16>,
    %c0_32 = arith.constant 0 : index
    %c130 = arith.constant 130 : index
    %38 = vector.load %arg11[%c0_32, %c130] : memref<64x384xbf16, #tpu.memory_space<vmem>>, vector<64x128xbf16>
    %c368 = arith.constant 368 : index
    %c0_33 = arith.constant 0 : index
    %39 = vector.load %arg13[%c368, %c0_33] : memref<992x128xbf16, #tpu.memory_space<vmem>>, vector<64x128xbf16>
    tpu.vector_store %arg13[%c368, %c0_33], %38 {strides = array<i32>} : memref<992x128xbf16, #tpu.memory_space<vmem>>, vector<64x128xbf16>,
    %c0_34 = arith.constant 0 : index
    %c131 = arith.constant 131 : index
    %40 = vector.load %arg11[%c0_34, %c131] : memref<64x384xbf16, #tpu.memory_space<vmem>>, vector<64x128xbf16>
    %c432 = arith.constant 432 : index
    %c0_35 = arith.constant 0 : index
    %41 = vector.load %arg13[%c432, %c0_35] : memref<992x128xbf16, #tpu.memory_space<vmem>>, vector<64x128xbf16>
    tpu.vector_store %arg13[%c432, %c0_35], %40 {strides = array<i32>} : memref<992x128xbf16, #tpu.memory_space<vmem>>, vector<64x128xbf16>,
    %c0_36 = arith.constant 0 : index
    %c132 = arith.constant 132 : index
    %42 = vector.load %arg11[%c0_36, %c132] : memref<64x384xbf16, #tpu.memory_space<vmem>>, vector<32x128xbf16>
    %c496 = arith.constant 496 : index
    %c0_37 = arith.constant 0 : index
    %43 = vector.load %arg13[%c496, %c0_37] : memref<992x128xbf16, #tpu.memory_space<vmem>>, vector<32x128xbf16>
    tpu.vector_store %arg13[%c496, %c0_37], %42 {strides = array<i32>} : memref<992x128xbf16, #tpu.memory_space<vmem>>, vector<32x128xbf16>,
    %c0_38 = arith.constant 0 : index
    %c0_39 = arith.constant 0 : index
    %44 = vector.load %arg4[%c0_38, %c0_39] : memref<64x528xbf16, #tpu.memory_space<vmem>>, vector<64x528xbf16>
    %c0_40 = arith.constant 0 : index
    %c0_41 = arith.constant 0 : index
    %45 = vector.load %arg5[%c0_40, %c0_41] : memref<64x1xf32, #tpu.memory_space<vmem>>, vector<64x1xf32>
    %c0_42 = arith.constant 0 : index
    %c0_43 = arith.constant 0 : index
    %46 = vector.load %arg13[%c0_42, %c0_43] : memref<992x128xbf16, #tpu.memory_space<vmem>>, vector<528x128xbf16>
    %cst_44 = arith.constant dense<0.000000e+00> : vector<64x128xf32>
    %47 = tpu.matmul %44, %46, %cst_44 {dimension_numbers = #tpu.dot_dimension_numbers<[1], [0], [0], [1], [0, 0, 1, 1], [], []>} : vector<64x528xbf16>, vector<528x128xbf16>, vector<64x128xf32> -> vector<64x128xf32>
    %48 = vector.broadcast %45 : vector<64x1xf32> to vector<64x128xf32>
    %49 = arith.addf %47, %48 : vector<64x128xf32>
    %cst_45 = arith.constant 0.000000e+00 : f32
    %50 = vector.broadcast %cst_45 : f32 to vector<64x128xf32>
    %51 = arith.maximumf %49, %50 : vector<64x128xf32>
    %52 = tpu.iota {dimensions = array<i32: 1>} : vector<64x128xi32>
    %c0_i32_46 = arith.constant 0 : i32
    %53 = vector.broadcast %c0_i32_46 : i32 to vector<64x128xi32>
    %54 = arith.addi %52, %53 : vector<64x128xi32>
    %c32_i32_47 = arith.constant 32 : i32
    %55 = vector.broadcast %c32_i32_47 : i32 to vector<64x128xi32>
    %56 = arith.cmpi slt, %54, %55 : vector<64x128xi32>
    %cst_48 = arith.constant 0.000000e+00 : f32
    %57 = vector.broadcast %cst_48 : f32 to vector<64x128xf32>
    %58 = arith.select %56, %51, %57 : vector<64x128xi1>, vector<64x128xf32>
    %59 = arith.truncf %58 : vector<64x128xf32> to vector<64x128xbf16>
    %c0_49 = arith.constant 0 : index
    %c128_50 = arith.constant 128 : index
    %60 = vector.load %arg12[%c0_49, %c128_50] : memref<64x384xbf16, #tpu.memory_space<vmem>>, vector<64x128xbf16>
    tpu.vector_store %arg12[%c0_49, %c128_50], %59 {strides = array<i32>} : memref<64x384xbf16, #tpu.memory_space<vmem>>, vector<64x128xbf16>,
    %c32 = arith.constant 32 : index
    %c120_51 = arith.constant 120 : index
    %61 = vector.load %arg12[%c32, %c120_51] : memref<64x384xbf16, #tpu.memory_space<vmem>>, vector<32x128xbf16>
    %c0_52 = arith.constant 0 : index
    %c0_53 = arith.constant 0 : index
    %62 = vector.load %arg13[%c0_52, %c0_53] : memref<992x128xbf16, #tpu.memory_space<vmem>>, vector<32x128xbf16>
    tpu.vector_store %arg13[%c0_52, %c0_53], %61 {strides = array<i32>} : memref<992x128xbf16, #tpu.memory_space<vmem>>, vector<32x128xbf16>,
    %c0_54 = arith.constant 0 : index
    %c121 = arith.constant 121 : index
    %63 = vector.load %arg12[%c0_54, %c121] : memref<64x384xbf16, #tpu.memory_space<vmem>>, vector<64x128xbf16>
    %c32_55 = arith.constant 32 : index
    %c0_56 = arith.constant 0 : index
    %64 = vector.load %arg13[%c32_55, %c0_56] : memref<992x128xbf16, #tpu.memory_space<vmem>>, vector<64x128xbf16>
    tpu.vector_store %arg13[%c32_55, %c0_56], %63 {strides = array<i32>} : memref<992x128xbf16, #tpu.memory_space<vmem>>, vector<64x128xbf16>,
    %c0_57 = arith.constant 0 : index
    %c122 = arith.constant 122 : index
    %65 = vector.load %arg12[%c0_57, %c122] : memref<64x384xbf16, #tpu.memory_space<vmem>>, vector<64x128xbf16>
    %c96 = arith.constant 96 : index
    %c0_58 = arith.constant 0 : index
    %66 = vector.load %arg13[%c96, %c0_58] : memref<992x128xbf16, #tpu.memory_space<vmem>>, vector<64x128xbf16>
    tpu.vector_store %arg13[%c96, %c0_58], %65 {strides = array<i32>} : memref<992x128xbf16, #tpu.memory_space<vmem>>, vector<64x128xbf16>,
    %c0_59 = arith.constant 0 : index
    %c123 = arith.constant 123 : index
    %67 = vector.load %arg12[%c0_59, %c123] : memref<64x384xbf16, #tpu.memory_space<vmem>>, vector<64x128xbf16>
    %c160 = arith.constant 160 : index
    %c0_60 = arith.constant 0 : index
    %68 = vector.load %arg13[%c160, %c0_60] : memref<992x128xbf16, #tpu.memory_space<vmem>>, vector<64x128xbf16>
    tpu.vector_store %arg13[%c160, %c0_60], %67 {strides = array<i32>} : memref<992x128xbf16, #tpu.memory_space<vmem>>, vector<64x128xbf16>,
    %c0_61 = arith.constant 0 : index
    %c124_62 = arith.constant 124 : index
    %69 = vector.load %arg12[%c0_61, %c124_62] : memref<64x384xbf16, #tpu.memory_space<vmem>>, vector<64x128xbf16>
    %c224 = arith.constant 224 : index
    %c0_63 = arith.constant 0 : index
    %70 = vector.load %arg13[%c224, %c0_63] : memref<992x128xbf16, #tpu.memory_space<vmem>>, vector<64x128xbf16>
    tpu.vector_store %arg13[%c224, %c0_63], %69 {strides = array<i32>} : memref<992x128xbf16, #tpu.memory_space<vmem>>, vector<64x128xbf16>,
    %c0_64 = arith.constant 0 : index
    %c125_65 = arith.constant 125 : index
    %71 = vector.load %arg12[%c0_64, %c125_65] : memref<64x384xbf16, #tpu.memory_space<vmem>>, vector<64x128xbf16>
    %c288 = arith.constant 288 : index
    %c0_66 = arith.constant 0 : index
    %72 = vector.load %arg13[%c288, %c0_66] : memref<992x128xbf16, #tpu.memory_space<vmem>>, vector<64x128xbf16>
    tpu.vector_store %arg13[%c288, %c0_66], %71 {strides = array<i32>} : memref<992x128xbf16, #tpu.memory_space<vmem>>, vector<64x128xbf16>,
    %c0_67 = arith.constant 0 : index
    %c126_68 = arith.constant 126 : index
    %73 = vector.load %arg12[%c0_67, %c126_68] : memref<64x384xbf16, #tpu.memory_space<vmem>>, vector<64x128xbf16>
    %c352 = arith.constant 352 : index
    %c0_69 = arith.constant 0 : index
    %74 = vector.load %arg13[%c352, %c0_69] : memref<992x128xbf16, #tpu.memory_space<vmem>>, vector<64x128xbf16>
    tpu.vector_store %arg13[%c352, %c0_69], %73 {strides = array<i32>} : memref<992x128xbf16, #tpu.memory_space<vmem>>, vector<64x128xbf16>,
    %c0_70 = arith.constant 0 : index
    %c127_71 = arith.constant 127 : index
    %75 = vector.load %arg12[%c0_70, %c127_71] : memref<64x384xbf16, #tpu.memory_space<vmem>>, vector<64x128xbf16>
    %c416 = arith.constant 416 : index
    %c0_72 = arith.constant 0 : index
    %76 = vector.load %arg13[%c416, %c0_72] : memref<992x128xbf16, #tpu.memory_space<vmem>>, vector<64x128xbf16>
    tpu.vector_store %arg13[%c416, %c0_72], %75 {strides = array<i32>} : memref<992x128xbf16, #tpu.memory_space<vmem>>, vector<64x128xbf16>,
    %c0_73 = arith.constant 0 : index
    %c128_74 = arith.constant 128 : index
    %77 = vector.load %arg12[%c0_73, %c128_74] : memref<64x384xbf16, #tpu.memory_space<vmem>>, vector<64x128xbf16>
    %c480 = arith.constant 480 : index
    %c0_75 = arith.constant 0 : index
    %78 = vector.load %arg13[%c480, %c0_75] : memref<992x128xbf16, #tpu.memory_space<vmem>>, vector<64x128xbf16>
    tpu.vector_store %arg13[%c480, %c0_75], %77 {strides = array<i32>} : memref<992x128xbf16, #tpu.memory_space<vmem>>, vector<64x128xbf16>,
    %c0_76 = arith.constant 0 : index
    %c129_77 = arith.constant 129 : index
    %79 = vector.load %arg12[%c0_76, %c129_77] : memref<64x384xbf16, #tpu.memory_space<vmem>>, vector<64x128xbf16>
    %c544 = arith.constant 544 : index
    %c0_78 = arith.constant 0 : index
    %80 = vector.load %arg13[%c544, %c0_78] : memref<992x128xbf16, #tpu.memory_space<vmem>>, vector<64x128xbf16>
    tpu.vector_store %arg13[%c544, %c0_78], %79 {strides = array<i32>} : memref<992x128xbf16, #tpu.memory_space<vmem>>, vector<64x128xbf16>,
    %c0_79 = arith.constant 0 : index
    %c130_80 = arith.constant 130 : index
    %81 = vector.load %arg12[%c0_79, %c130_80] : memref<64x384xbf16, #tpu.memory_space<vmem>>, vector<64x128xbf16>
    %c608 = arith.constant 608 : index
    %c0_81 = arith.constant 0 : index
    %82 = vector.load %arg13[%c608, %c0_81] : memref<992x128xbf16, #tpu.memory_space<vmem>>, vector<64x128xbf16>
    tpu.vector_store %arg13[%c608, %c0_81], %81 {strides = array<i32>} : memref<992x128xbf16, #tpu.memory_space<vmem>>, vector<64x128xbf16>,
    %c0_82 = arith.constant 0 : index
    %c131_83 = arith.constant 131 : index
    %83 = vector.load %arg12[%c0_82, %c131_83] : memref<64x384xbf16, #tpu.memory_space<vmem>>, vector<64x128xbf16>
    %c672 = arith.constant 672 : index
    %c0_84 = arith.constant 0 : index
    %84 = vector.load %arg13[%c672, %c0_84] : memref<992x128xbf16, #tpu.memory_space<vmem>>, vector<64x128xbf16>
    tpu.vector_store %arg13[%c672, %c0_84], %83 {strides = array<i32>} : memref<992x128xbf16, #tpu.memory_space<vmem>>, vector<64x128xbf16>,
    %c0_85 = arith.constant 0 : index
    %c132_86 = arith.constant 132 : index
    %85 = vector.load %arg12[%c0_85, %c132_86] : memref<64x384xbf16, #tpu.memory_space<vmem>>, vector<64x128xbf16>
    %c736 = arith.constant 736 : index
    %c0_87 = arith.constant 0 : index
    %86 = vector.load %arg13[%c736, %c0_87] : memref<992x128xbf16, #tpu.memory_space<vmem>>, vector<64x128xbf16>
    tpu.vector_store %arg13[%c736, %c0_87], %85 {strides = array<i32>} : memref<992x128xbf16, #tpu.memory_space<vmem>>, vector<64x128xbf16>,
    %c0_88 = arith.constant 0 : index
    %c133 = arith.constant 133 : index
    %87 = vector.load %arg12[%c0_88, %c133] : memref<64x384xbf16, #tpu.memory_space<vmem>>, vector<64x128xbf16>
    %c800 = arith.constant 800 : index
    %c0_89 = arith.constant 0 : index
    %88 = vector.load %arg13[%c800, %c0_89] : memref<992x128xbf16, #tpu.memory_space<vmem>>, vector<64x128xbf16>
    tpu.vector_store %arg13[%c800, %c0_89], %87 {strides = array<i32>} : memref<992x128xbf16, #tpu.memory_space<vmem>>, vector<64x128xbf16>,
    %c0_90 = arith.constant 0 : index
    %c134 = arith.constant 134 : index
    %89 = vector.load %arg12[%c0_90, %c134] : memref<64x384xbf16, #tpu.memory_space<vmem>>, vector<64x128xbf16>
    %c864 = arith.constant 864 : index
    %c0_91 = arith.constant 0 : index
    %90 = vector.load %arg13[%c864, %c0_91] : memref<992x128xbf16, #tpu.memory_space<vmem>>, vector<64x128xbf16>
    tpu.vector_store %arg13[%c864, %c0_91], %89 {strides = array<i32>} : memref<992x128xbf16, #tpu.memory_space<vmem>>, vector<64x128xbf16>,
    %c0_92 = arith.constant 0 : index
    %c135 = arith.constant 135 : index
    %91 = vector.load %arg12[%c0_92, %c135] : memref<64x384xbf16, #tpu.memory_space<vmem>>, vector<64x128xbf16>
    %c928 = arith.constant 928 : index
    %c0_93 = arith.constant 0 : index
    %92 = vector.load %arg13[%c928, %c0_93] : memref<992x128xbf16, #tpu.memory_space<vmem>>, vector<64x128xbf16>
    tpu.vector_store %arg13[%c928, %c0_93], %91 {strides = array<i32>} : memref<992x128xbf16, #tpu.memory_space<vmem>>, vector<64x128xbf16>,
    %c0_94 = arith.constant 0 : index
    %c0_95 = arith.constant 0 : index
    %93 = vector.load %arg6[%c0_94, %c0_95] : memref<64x992xbf16, #tpu.memory_space<vmem>>, vector<64x992xbf16>
    %c0_96 = arith.constant 0 : index
    %c0_97 = arith.constant 0 : index
    %94 = vector.load %arg7[%c0_96, %c0_97] : memref<64x1xf32, #tpu.memory_space<vmem>>, vector<64x1xf32>
    %c0_98 = arith.constant 0 : index
    %c0_99 = arith.constant 0 : index
    %95 = vector.load %arg13[%c0_98, %c0_99] : memref<992x128xbf16, #tpu.memory_space<vmem>>, vector<992x128xbf16>
    %cst_100 = arith.constant dense<0.000000e+00> : vector<64x128xf32>
    %96 = tpu.matmul %93, %95, %cst_100 {dimension_numbers = #tpu.dot_dimension_numbers<[1], [0], [0], [1], [0, 0, 1, 1], [], []>} : vector<64x992xbf16>, vector<992x128xbf16>, vector<64x128xf32> -> vector<64x128xf32>
    %97 = vector.broadcast %94 : vector<64x1xf32> to vector<64x128xf32>
    %98 = arith.addf %96, %97 : vector<64x128xf32>
    %cst_101 = arith.constant 0.000000e+00 : f32
    %99 = vector.broadcast %cst_101 : f32 to vector<64x128xf32>
    %100 = arith.maximumf %98, %99 : vector<64x128xf32>
    %101 = tpu.iota {dimensions = array<i32: 1>} : vector<64x128xi32>
    %c0_i32_102 = arith.constant 0 : i32
    %102 = vector.broadcast %c0_i32_102 : i32 to vector<64x128xi32>
    %103 = arith.addi %101, %102 : vector<64x128xi32>
    %c32_i32_103 = arith.constant 32 : i32
    %104 = vector.broadcast %c32_i32_103 : i32 to vector<64x128xi32>
    %105 = arith.cmpi slt, %103, %104 : vector<64x128xi32>
    %cst_104 = arith.constant 0.000000e+00 : f32
    %106 = vector.broadcast %cst_104 : f32 to vector<64x128xf32>
    %107 = arith.select %105, %100, %106 : vector<64x128xi1>, vector<64x128xf32>
    %cst_105 = arith.constant dense<0.000000e+00> : vector<64xf32>
    %108 = vector.multi_reduction <add>, %107, %cst_105 [1] : vector<64x128xf32> to vector<64xf32>
    %109 = vector.shape_cast %108 : vector<64xf32> to vector<64x1xf32>
    %cst_106 = arith.constant 3.125000e-02 : f32
    %110 = vector.broadcast %cst_106 : f32 to vector<64x1xf32>
    %111 = arith.mulf %109, %110 : vector<64x1xf32>
    %c0_107 = arith.constant 0 : index
    %c0_108 = arith.constant 0 : index
    %112 = vector.load %arg8[%c0_107, %c0_108] : memref<64x1xf32, #tpu.memory_space<vmem>>, vector<64x1xf32>
    %113 = arith.mulf %111, %112 : vector<64x1xf32>
    %cst_109 = arith.constant dense<0.000000e+00> : vector<1xf32>
    %114 = vector.multi_reduction <add>, %113, %cst_109 [0] : vector<64x1xf32> to vector<1xf32>
    %115 = vector.shape_cast %114 : vector<1xf32> to vector<1x1xf32>
    %c0_110 = arith.constant 0 : index
    %c0_111 = arith.constant 0 : index
    %116 = vector.load %arg9[%c0_110, %c0_111] : memref<1x1xf32, #tpu.memory_space<vmem>>, vector<1x1xf32>
    %117 = arith.addf %115, %116 : vector<1x1xf32>
    %c0_112 = arith.constant 0 : index
    %c0_113 = arith.constant 0 : index
    %c0_114 = arith.constant 0 : index
    %118 = vector.load %arg10[%c0_112, %c0_113, %c0_114] : memref<1x1x1xf32, #tpu.memory_space<vmem>>, vector<1x1x1xf32>
    %119 = vector.shape_cast %118 : vector<1x1x1xf32> to vector<1x1xf32>
    %120 = vector.shape_cast %117 : vector<1x1xf32> to vector<1x1x1xf32>
    tpu.vector_store %arg10[%c0_112, %c0_113, %c0_114], %120 {strides = array<i32>} : memref<1x1x1xf32, #tpu.memory_space<vmem>>, vector<1x1x1xf32>,
    return
  }
  func.func @transform_0(%arg0: i32) -> (i32, i32, i32) {
    %c0_i32 = arith.constant 0 : i32
    %c0_i32_0 = arith.constant 0 : i32
    %c0_i32_1 = arith.constant 0 : i32
    return %arg0, %c0_i32, %c0_i32_0 : i32, i32, i32
  }
  func.func @transform_1(%arg0: i32) -> (i32, i32) {
    %c0_i32 = arith.constant 0 : i32
    %c0_i32_0 = arith.constant 0 : i32
    %c0_i32_1 = arith.constant 0 : i32
    return %c0_i32, %c0_i32_0 : i32, i32
  }
  func.func @transform_2(%arg0: i32) -> (i32, i32) {
    %c0_i32 = arith.constant 0 : i32
    %c0_i32_0 = arith.constant 0 : i32
    %c0_i32_1 = arith.constant 0 : i32
    return %c0_i32, %c0_i32_0 : i32, i32
  }
  func.func @transform_3(%arg0: i32) -> (i32, i32) {
    %c0_i32 = arith.constant 0 : i32
    %c0_i32_0 = arith.constant 0 : i32
    %c0_i32_1 = arith.constant 0 : i32
    return %c0_i32, %c0_i32_0 : i32, i32
  }
  func.func @transform_4(%arg0: i32) -> (i32, i32) {
    %c0_i32 = arith.constant 0 : i32
    %c0_i32_0 = arith.constant 0 : i32
    %c0_i32_1 = arith.constant 0 : i32
    return %c0_i32, %c0_i32_0 : i32, i32
  }
  func.func @transform_5(%arg0: i32) -> (i32, i32) {
    %c0_i32 = arith.constant 0 : i32
    %c0_i32_0 = arith.constant 0 : i32
    %c0_i32_1 = arith.constant 0 : i32
    return %c0_i32, %c0_i32_0 : i32, i32
  }
  func.func @transform_6(%arg0: i32) -> (i32, i32) {
    %c0_i32 = arith.constant 0 : i32
    %c0_i32_0 = arith.constant 0 : i32
    %c0_i32_1 = arith.constant 0 : i32
    return %c0_i32, %c0_i32_0 : i32, i32
  }
  func.func @transform_7(%arg0: i32) -> (i32, i32) {
    %c0_i32 = arith.constant 0 : i32
    %c0_i32_0 = arith.constant 0 : i32
    %c0_i32_1 = arith.constant 0 : i32
    return %c0_i32, %c0_i32_0 : i32, i32
  }
  func.func @transform_8(%arg0: i32) -> (i32, i32) {
    %c0_i32 = arith.constant 0 : i32
    %c0_i32_0 = arith.constant 0 : i32
    %c0_i32_1 = arith.constant 0 : i32
    return %c0_i32, %c0_i32_0 : i32, i32
  }
  func.func @transform_9(%arg0: i32) -> (i32, i32, i32) {
    %c0_i32 = arith.constant 0 : i32
    %c0_i32_0 = arith.constant 0 : i32
    %c0_i32_1 = arith.constant 0 : i32
    return %arg0, %c0_i32, %c0_i32_0 : i32, i32, i32
  }
}

</mosaic_0001>

<llo_original>
// kernel: tile.14
$region0: #{tile.14}
  #allocation0 [shape = 's32[1]{0}', space=sflag, size = 0x4, scoped, tag = 'scoped memory for tile.14']
  %s0 = inlined_call_operand.vmem [shape: f32[16], index: 0, kind: input, shape index: {}]
  %s1 = inlined_call_operand.vmem [shape: f32[4,16], index: 1, kind: output, shape index: {}]
  // Predicated region
  $region2: #{tile.14} parent=0 // pred_check
    _
  $region3: #{tile.14} parent=0 // pred_check_branch
    %3 = sbr.rel (0) target = $region5
  $region4: #{tile.14} parent=0 // pred_region
    _
  $region5: #{tile.14} parent=0 // pred_fallthru
    _
  %v4 = vld [vmem:[%s0] ss:$0 sm:$0xff]
  %5 = vst [vmem:[%s1] sm:$0xf] %v4

// kernel: tile.0
$region0: #{tile.0}
  %s0 = inlined_call_operand.vmem [shape: f32[4,16], index: 0, kind: input, shape index: {}]
  %s1 = inlined_call_operand.vmem [shape: f32[64,1], index: 1, kind: output, shape index: {}]
  $region1: #{tile.0} parent=0
    #allocation0 [shape = 'u8[4096]{0}', space=vmem, size = 0x1000, scoped, tag = 'scoped mem for input reshape']
    %s3 = ssub.s32 16, 1
    %v4 = vld [vmem:[%s0] sm:%s3]
    %5 = vst [vmem:[#allocation0] sm:%s3] %v4
    %v6 = vld [vmem:[#allocation0] sm:$0xf]
    %vm7 = vcmask 7168
    %8 = vst.msk [vmem:[%s1] ss:$16 sm:$0x3] %vm7, %v6
    %9 = vst.msk [vmem:[%s1] ss:$16 sm:$0xc] %vm7, %v6
    %v10 = vld [vmem:[#allocation0] sm:$0xf]
    %11 = vrot.lane.b32.xlu0 %v10, 127
    %v12 = vpop.permute.xlu0 %11
    %vm13 = vcmask 7168
    %s14 = scalar_lea.vmem %s1, 1
    %15 = vst.msk [vmem:[%s14] ss:$16 sm:$0x3] %vm13, %v12
    %s16 = scalar_lea.vmem %s1, 1
    %17 = vst.msk [vmem:[%s16] ss:$16 sm:$0xc] %vm13, %v12
    %v18 = vld [vmem:[#allocation0] sm:$0xf]
    %19 = vrot.lane.b32.xlu0 %v18, 126
    %v20 = vpop.permute.xlu0 %19
    %vm21 = vcmask 7168
    %s22 = scalar_lea.vmem %s1, 2
    %23 = vst.msk [vmem:[%s22] ss:$16 sm:$0x3] %vm21, %v20
    %s24 = scalar_lea.vmem %s1, 2
    %25 = vst.msk [vmem:[%s24] ss:$16 sm:$0xc] %vm21, %v20
    %v26 = vld [vmem:[#allocation0] sm:$0xf]
    %27 = vrot.lane.b32.xlu0 %v26, 125
    %v28 = vpop.permute.xlu0 %27
    %vm29 = vcmask 7168
    %s30 = scalar_lea.vmem %s1, 3
    %31 = vst.msk [vmem:[%s30] ss:$16 sm:$0x3] %vm29, %v28
    %s32 = scalar_lea.vmem %s1, 3
    %33 = vst.msk [vmem:[%s32] ss:$16 sm:$0xc] %vm29, %v28
    %v34 = vld [vmem:[#allocation0] sm:$0xf]
    %35 = vrot.lane.b32.xlu0 %v34, 124
    %v36 = vpop.permute.xlu0 %35
    %vm37 = vcmask 7168
    %s38 = scalar_lea.vmem %s1, 4
    %39 = vst.msk [vmem:[%s38] ss:$16 sm:$0x3] %vm37, %v36
    %s40 = scalar_lea.vmem %s1, 4
    %41 = vst.msk [vmem:[%s40] ss:$16 sm:$0xc] %vm37, %v36
    %v42 = vld [vmem:[#allocation0] sm:$0xf]
    %43 = vrot.lane.b32.xlu0 %v42, 123
    %v44 = vpop.permute.xlu0 %43
    %vm45 = vcmask 7168
    %s46 = scalar_lea.vmem %s1, 5
    %47 = vst.msk [vmem:[%s46] ss:$16 sm:$0x3] %vm45, %v44
    %s48 = scalar_lea.vmem %s1, 5
    %49 = vst.msk [vmem:[%s48] ss:$16 sm:$0xc] %vm45, %v44
    %v50 = vld [vmem:[#allocation0] sm:$0xf]
    %51 = vrot.lane.b32.xlu0 %v50, 122
    %v52 = vpop.permute.xlu0 %51
    %vm53 = vcmask 7168
    %s54 = scalar_lea.vmem %s1, 6
    %55 = vst.msk [vmem:[%s54] ss:$16 sm:$0x3] %vm53, %v52
    %s56 = scalar_lea.vmem %s1, 6
    %57 = vst.msk [vmem:[%s56] ss:$16 sm:$0xc] %vm53, %v52
    %v58 = vld [vmem:[#allocation0] sm:$0xf]
    %59 = vrot.lane.b32.xlu0 %v58, 121
    %v60 = vpop.permute.xlu0 %59
    %vm61 = vcmask 7168
    %s62 = scalar_lea.vmem %s1, 7
    %63 = vst.msk [vmem:[%s62] ss:$16 sm:$0x3] %vm61, %v60
    %s64 = scalar_lea.vmem %s1, 7
    %65 = vst.msk [vmem:[%s64] ss:$16 sm:$0xc] %vm61, %v60
    %v66 = vld [vmem:[#allocation0] sm:$0xf]
    %67 = vrot.lane.b32.xlu0 %v66, 120
    %v68 = vpop.permute.xlu0 %67
    %vm69 = vcmask 7168
    %s70 = scalar_lea.vmem %s1, 8
    %71 = vst.msk [vmem:[%s70] ss:$16 sm:$0x3] %vm69, %v68
    %s72 = scalar_lea.vmem %s1, 8
    %73 = vst.msk [vmem:[%s72] ss:$16 sm:$0xc] %vm69, %v68
    %v74 = vld [vmem:[#allocation0] sm:$0xf]
    %75 = vrot.lane.b32.xlu0 %v74, 119
    %v76 = vpop.permute.xlu0 %75
    %vm77 = vcmask 7168
    %s78 = scalar_lea.vmem %s1, 9
    %79 = vst.msk [vmem:[%s78] ss:$16 sm:$0x3] %vm77, %v76
    %s80 = scalar_lea.vmem %s1, 9
    %81 = vst.msk [vmem:[%s80] ss:$16 sm:$0xc] %vm77, %v76
    %v82 = vld [vmem:[#allocation0] sm:$0xf]
    %83 = vrot.lane.b32.xlu0 %v82, 118
    %v84 = vpop.permute.xlu0 %83
    %vm85 = vcmask 7168
    %s86 = scalar_lea.vmem %s1, 10
    %87 = vst.msk [vmem:[%s86] ss:$16 sm:$0x3] %vm85, %v84
    %s88 = scalar_lea.vmem %s1, 10
    %89 = vst.msk [vmem:[%s88] ss:$16 sm:$0xc] %vm85, %v84
    %v90 = vld [vmem:[#allocation0] sm:$0xf]
    %91 = vrot.lane.b32.xlu0 %v90, 117
    %v92 = vpop.permute.xlu0 %91
    %vm93 = vcmask 7168
    %s94 = scalar_lea.vmem %s1, 11
    %95 = vst.msk [vmem:[%s94] ss:$16 sm:$0x3] %vm93, %v92
    %s96 = scalar_lea.vmem %s1, 11
    %97 = vst.msk [vmem:[%s96] ss:$16 sm:$0xc] %vm93, %v92
    %v98 = vld [vmem:[#allocation0] sm:$0xf]
    %99 = vrot.lane.b32.xlu0 %v98, 116
    %v100 = vpop.permute.xlu0 %99
    %vm101 = vcmask 7168
    %s102 = scalar_lea.vmem %s1, 12
    %103 = vst.msk [vmem:[%s102] ss:$16 sm:$0x3] %vm101, %v100
    %s104 = scalar_lea.vmem %s1, 12
    %105 = vst.msk [vmem:[%s104] ss:$16 sm:$0xc] %vm101, %v100
    %v106 = vld [vmem:[#allocation0] sm:$0xf]
    %107 = vrot.lane.b32.xlu0 %v106, 115
    %v108 = vpop.permute.xlu0 %107
    %vm109 = vcmask 7168
    %s110 = scalar_lea.vmem %s1, 13
    %111 = vst.msk [vmem:[%s110] ss:$16 sm:$0x3] %vm109, %v108
    %s112 = scalar_lea.vmem %s1, 13
    %113 = vst.msk [vmem:[%s112] ss:$16 sm:$0xc] %vm109, %v108
    %v114 = vld [vmem:[#allocation0] sm:$0xf]
    %115 = vrot.lane.b32.xlu0 %v114, 114
    %v116 = vpop.permute.xlu0 %115
    %vm117 = vcmask 7168
    %s118 = scalar_lea.vmem %s1, 14
    %119 = vst.msk [vmem:[%s118] ss:$16 sm:$0x3] %vm117, %v116
    %s120 = scalar_lea.vmem %s1, 14
    %121 = vst.msk [vmem:[%s120] ss:$16 sm:$0xc] %vm117, %v116
    %v122 = vld [vmem:[#allocation0] sm:$0xf]
    %123 = vrot.lane.b32.xlu0 %v122, 113
    %v124 = vpop.permute.xlu0 %123
    %vm125 = vcmask 7168
    %s126 = scalar_lea.vmem %s1, 15
    %127 = vst.msk [vmem:[%s126] ss:$16 sm:$0x3] %vm125, %v124
    %s128 = scalar_lea.vmem %s1, 15
    %129 = vst.msk [vmem:[%s128] ss:$16 sm:$0xc] %vm125, %v124

// kernel: tile.19
$region0: #{tile.19}
  #allocation0 [shape = 's32[1]{0}', space=sflag, size = 0x4, scoped, tag = 'scoped memory for tile.19']
  %s0 = inlined_call_operand.vmem [shape: f32[32], index: 0, kind: input, shape index: {}]
  %s1 = inlined_call_operand.vmem [shape: f32[2,32], index: 1, kind: output, shape index: {}]
  // Predicated region
  $region2: #{tile.19} parent=0 // pred_check
    _
  $region3: #{tile.19} parent=0 // pred_check_branch
    %3 = sbr.rel (0) target = $region5
  $region4: #{tile.19} parent=0 // pred_region
    _
  $region5: #{tile.19} parent=0 // pred_fallthru
    _
  %v4 = vld [vmem:[%s0] ss:$0 sm:$0xff]
  %5 = vst [vmem:[%s1] sm:$0x3] %v4

// kernel: tile.1
$region0: #{tile.1}
  %s0 = inlined_call_operand.vmem [shape: f32[2,32], index: 0, kind: input, shape index: {}]
  %s1 = inlined_call_operand.vmem [shape: f32[64,1], index: 1, kind: output, shape index: {}]
  $region1: #{tile.1} parent=0
    #allocation0 [shape = 'u8[4096]{0}', space=vmem, size = 0x1000, scoped, tag = 'scoped mem for input reshape']
    %s3 = ssub.s32 4, 1
    %v4 = vld [vmem:[%s0] sm:%s3]
    %5 = vst [vmem:[#allocation0] sm:%s3] %v4
    %v6 = vld [vmem:[#allocation0] sm:$0x3]
    %vm7 = vcmask 7168
    %8 = vst.msk [vmem:[%s1] sm:$0x1] %vm7, %v6
    %s9 = scalar_lea.vmem %s1, 31
    %10 = vst.msk [vmem:[%s9] sm:$0x2] %vm7, %v6
    %v11 = vld [vmem:[#allocation0] sm:$0x3]
    %12 = vrot.lane.b32.xlu0 %v11, 127
    %v13 = vpop.permute.xlu0 %12
    %vm14 = vcmask 7168
    %s15 = scalar_lea.vmem %s1, 1
    %16 = vst.msk [vmem:[%s15] sm:$0x1] %vm14, %v13
    %s17 = scalar_lea.vmem %s1, 32
    %18 = vst.msk [vmem:[%s17] sm:$0x2] %vm14, %v13
    %v19 = vld [vmem:[#allocation0] sm:$0x3]
    %20 = vrot.lane.b32.xlu0 %v19, 126
    %v21 = vpop.permute.xlu0 %20
    %vm22 = vcmask 7168
    %s23 = scalar_lea.vmem %s1, 2
    %24 = vst.msk [vmem:[%s23] sm:$0x1] %vm22, %v21
    %s25 = scalar_lea.vmem %s1, 33
    %26 = vst.msk [vmem:[%s25] sm:$0x2] %vm22, %v21
    %v27 = vld [vmem:[#allocation0] sm:$0x3]
    %28 = vrot.lane.b32.xlu0 %v27, 125
    %v29 = vpop.permute.xlu0 %28
    %vm30 = vcmask 7168
    %s31 = scalar_lea.vmem %s1, 3
    %32 = vst.msk [vmem:[%s31] sm:$0x1] %vm30, %v29
    %s33 = scalar_lea.vmem %s1, 34
    %34 = vst.msk [vmem:[%s33] sm:$0x2] %vm30, %v29
    %v35 = vld [vmem:[#allocation0] sm:$0x3]
    %36 = vrot.lane.b32.xlu0 %v35, 124
    %v37 = vpop.permute.xlu0 %36
    %vm38 = vcmask 7168
    %s39 = scalar_lea.vmem %s1, 4
    %40 = vst.msk [vmem:[%s39] sm:$0x1] %vm38, %v37
    %s41 = scalar_lea.vmem %s1, 35
    %42 = vst.msk [vmem:[%s41] sm:$0x2] %vm38, %v37
    %v43 = vld [vmem:[#allocation0] sm:$0x3]
    %44 = vrot.lane.b32.xlu0 %v43, 123
    %v45 = vpop.permute.xlu0 %44
    %vm46 = vcmask 7168
    %s47 = scalar_lea.vmem %s1, 5
    %48 = vst.msk [vmem:[%s47] sm:$0x1] %vm46, %v45
    %s49 = scalar_lea.vmem %s1, 36
    %50 = vst.msk [vmem:[%s49] sm:$0x2] %vm46, %v45
    %v51 = vld [vmem:[#allocation0] sm:$0x3]
    %52 = vrot.lane.b32.xlu0 %v51, 122
    %v53 = vpop.permute.xlu0 %52
    %vm54 = vcmask 7168
    %s55 = scalar_lea.vmem %s1, 6
    %56 = vst.msk [vmem:[%s55] sm:$0x1] %vm54, %v53
    %s57 = scalar_lea.vmem %s1, 37
    %58 = vst.msk [vmem:[%s57] sm:$0x2] %vm54, %v53
    %v59 = vld [vmem:[#allocation0] sm:$0x3]
    %60 = vrot.lane.b32.xlu0 %v59, 121
    %v61 = vpop.permute.xlu0 %60
    %vm62 = vcmask 7168
    %s63 = scalar_lea.vmem %s1, 7
    %64 = vst.msk [vmem:[%s63] sm:$0x1] %vm62, %v61
    %s65 = scalar_lea.vmem %s1, 38
    %66 = vst.msk [vmem:[%s65] sm:$0x2] %vm62, %v61
    %v67 = vld [vmem:[#allocation0] sm:$0x3]
    %68 = vrot.lane.b32.xlu0 %v67, 120
    %v69 = vpop.permute.xlu0 %68
    %vm70 = vcmask 7168
    %s71 = scalar_lea.vmem %s1, 8
    %72 = vst.msk [vmem:[%s71] sm:$0x1] %vm70, %v69
    %s73 = scalar_lea.vmem %s1, 39
    %74 = vst.msk [vmem:[%s73] sm:$0x2] %vm70, %v69
    %v75 = vld [vmem:[#allocation0] sm:$0x3]
    %76 = vrot.lane.b32.xlu0 %v75, 119
    %v77 = vpop.permute.xlu0 %76
    %vm78 = vcmask 7168
    %s79 = scalar_lea.vmem %s1, 9
    %80 = vst.msk [vmem:[%s79] sm:$0x1] %vm78, %v77
    %s81 = scalar_lea.vmem %s1, 40
    %82 = vst.msk [vmem:[%s81] sm:$0x2] %vm78, %v77
    %v83 = vld [vmem:[#allocation0] sm:$0x3]
    %84 = vrot.lane.b32.xlu0 %v83, 118
    %v85 = vpop.permute.xlu0 %84
    %vm86 = vcmask 7168
    %s87 = scalar_lea.vmem %s1, 10
    %88 = vst.msk [vmem:[%s87] sm:$0x1] %vm86, %v85
    %s89 = scalar_lea.vmem %s1, 41
    %90 = vst.msk [vmem:[%s89] sm:$0x2] %vm86, %v85
    %v91 = vld [vmem:[#allocation0] sm:$0x3]
    %92 = vrot.lane.b32.xlu0 %v91, 117
    %v93 = vpop.permute.xlu0 %92
    %vm94 = vcmask 7168
    %s95 = scalar_lea.vmem %s1, 11
    %96 = vst.msk [vmem:[%s95] sm:$0x1] %vm94, %v93
    %s97 = scalar_lea.vmem %s1, 42
    %98 = vst.msk [vmem:[%s97] sm:$0x2] %vm94, %v93
    %v99 = vld [vmem:[#allocation0] sm:$0x3]
    %100 = vrot.lane.b32.xlu0 %v99, 116
    %v101 = vpop.permute.xlu0 %100
    %vm102 = vcmask 7168
    %s103 = scalar_lea.vmem %s1, 12
    %104 = vst.msk [vmem:[%s103] sm:$0x1] %vm102, %v101
    %s105 = scalar_lea.vmem %s1, 43
    %106 = vst.msk [vmem:[%s105] sm:$0x2] %vm102, %v101
    %v107 = vld [vmem:[#allocation0] sm:$0x3]
    %108 = vrot.lane.b32.xlu0 %v107, 115
    %v109 = vpop.permute.xlu0 %108
    %vm110 = vcmask 7168
    %s111 = scalar_lea.vmem %s1, 13
    %112 = vst.msk [vmem:[%s111] sm:$0x1] %vm110, %v109
    %s113 = scalar_lea.vmem %s1, 44
    %114 = vst.msk [vmem:[%s113] sm:$0x2] %vm110, %v109
    %v115 = vld [vmem:[#allocation0] sm:$0x3]
    %116 = vrot.lane.b32.xlu0 %v115, 114
    %v117 = vpop.permute.xlu0 %116
    %vm118 = vcmask 7168
    %s119 = scalar_lea.vmem %s1, 14
    %120 = vst.msk [vmem:[%s119] sm:$0x1] %vm118, %v117
    %s121 = scalar_lea.vmem %s1, 45
    %122 = vst.msk [vmem:[%s121] sm:$0x2] %vm118, %v117
    %v123 = vld [vmem:[#allocation0] sm:$0x3]
    %124 = vrot.lane.b32.xlu0 %v123, 113
    %v125 = vpop.permute.xlu0 %124
    %vm126 = vcmask 7168
    %s127 = scalar_lea.vmem %s1, 15
    %128 = vst.msk [vmem:[%s127] sm:$0x1] %vm126, %v125
    %s129 = scalar_lea.vmem %s1, 46
    %130 = vst.msk [vmem:[%s129] sm:$0x2] %vm126, %v125
    %v131 = vld [vmem:[#allocation0] sm:$0x3]
    %132 = vrot.lane.b32.xlu0 %v131, 112
    %v133 = vpop.permute.xlu0 %132
    %vm134 = vcmask 7168
    %s135 = scalar_lea.vmem %s1, 16
    %136 = vst.msk [vmem:[%s135] sm:$0x1] %vm134, %v133
    %s137 = scalar_lea.vmem %s1, 47
    %138 = vst.msk [vmem:[%s137] sm:$0x2] %vm134, %v133
    %v139 = vld [vmem:[#allocation0] sm:$0x3]
    %140 = vrot.lane.b32.xlu0 %v139, 111
    %v141 = vpop.permute.xlu0 %140
    %vm142 = vcmask 7168
    %s143 = scalar_lea.vmem %s1, 17
    %144 = vst.msk [vmem:[%s143] sm:$0x1] %vm142, %v141
    %s145 = scalar_lea.vmem %s1, 48
    %146 = vst.msk [vmem:[%s145] sm:$0x2] %vm142, %v141
    %v147 = vld [vmem:[#allocation0] sm:$0x3]
    %148 = vrot.lane.b32.xlu0 %v147, 110
    %v149 = vpop.permute.xlu0 %148
    %vm150 = vcmask 7168
    %s151 = scalar_lea.vmem %s1, 18
    %152 = vst.msk [vmem:[%s151] sm:$0x1] %vm150, %v149
    %s153 = scalar_lea.vmem %s1, 49
    %154 = vst.msk [vmem:[%s153] sm:$0x2] %vm150, %v149
    %v155 = vld [vmem:[#allocation0] sm:$0x3]
    %156 = vrot.lane.b32.xlu0 %v155, 109
    %v157 = vpop.permute.xlu0 %156
    %vm158 = vcmask 7168
    %s159 = scalar_lea.vmem %s1, 19
    %160 = vst.msk [vmem:[%s159] sm:$0x1] %vm158, %v157
    %s161 = scalar_lea.vmem %s1, 50
    %162 = vst.msk [vmem:[%s161] sm:$0x2] %vm158, %v157
    %v163 = vld [vmem:[#allocation0] sm:$0x3]
    %164 = vrot.lane.b32.xlu0 %v163, 108
    %v165 = vpop.permute.xlu0 %164
    %vm166 = vcmask 7168
    %s167 = scalar_lea.vmem %s1, 20
    %168 = vst.msk [vmem:[%s167] sm:$0x1] %vm166, %v165
    %s169 = scalar_lea.vmem %s1, 51
    %170 = vst.msk [vmem:[%s169] sm:$0x2] %vm166, %v165
    %v171 = vld [vmem:[#allocation0] sm:$0x3]
    %172 = vrot.lane.b32.xlu0 %v171, 107
    %v173 = vpop.permute.xlu0 %172
    %vm174 = vcmask 7168
    %s175 = scalar_lea.vmem %s1, 21
    %176 = vst.msk [vmem:[%s175] sm:$0x1] %vm174, %v173
    %s177 = scalar_lea.vmem %s1, 52
    %178 = vst.msk [vmem:[%s177] sm:$0x2] %vm174, %v173
    %v179 = vld [vmem:[#allocation0] sm:$0x3]
    %180 = vrot.lane.b32.xlu0 %v179, 106
    %v181 = vpop.permute.xlu0 %180
    %vm182 = vcmask 7168
    %s183 = scalar_lea.vmem %s1, 22
    %184 = vst.msk [vmem:[%s183] sm:$0x1] %vm182, %v181
    %s185 = scalar_lea.vmem %s1, 53
    %186 = vst.msk [vmem:[%s185] sm:$0x2] %vm182, %v181
    %v187 = vld [vmem:[#allocation0] sm:$0x3]
    %188 = vrot.lane.b32.xlu0 %v187, 105
    %v189 = vpop.permute.xlu0 %188
    %vm190 = vcmask 7168
    %s191 = scalar_lea.vmem %s1, 23
    %192 = vst.msk [vmem:[%s191] sm:$0x1] %vm190, %v189
    %s193 = scalar_lea.vmem %s1, 54
    %194 = vst.msk [vmem:[%s193] sm:$0x2] %vm190, %v189
    %v195 = vld [vmem:[#allocation0] sm:$0x3]
    %196 = vrot.lane.b32.xlu0 %v195, 104
    %v197 = vpop.permute.xlu0 %196
    %vm198 = vcmask 7168
    %s199 = scalar_lea.vmem %s1, 24
    %200 = vst.msk [vmem:[%s199] sm:$0x1] %vm198, %v197
    %s201 = scalar_lea.vmem %s1, 55
    %202 = vst.msk [vmem:[%s201] sm:$0x2] %vm198, %v197
    %v203 = vld [vmem:[#allocation0] sm:$0x3]
    %204 = vrot.lane.b32.xlu0 %v203, 103
    %v205 = vpop.permute.xlu0 %204
    %vm206 = vcmask 7168
    %s207 = scalar_lea.vmem %s1, 25
    %208 = vst.msk [vmem:[%s207] sm:$0x1] %vm206, %v205
    %s209 = scalar_lea.vmem %s1, 56
    %210 = vst.msk [vmem:[%s209] sm:$0x2] %vm206, %v205
    %v211 = vld [vmem:[#allocation0] sm:$0x3]
    %212 = vrot.lane.b32.xlu0 %v211, 102
    %v213 = vpop.permute.xlu0 %212
    %vm214 = vcmask 7168
    %s215 = scalar_lea.vmem %s1, 26
    %216 = vst.msk [vmem:[%s215] sm:$0x1] %vm214, %v213
    %s217 = scalar_lea.vmem %s1, 57
    %218 = vst.msk [vmem:[%s217] sm:$0x2] %vm214, %v213
    %v219 = vld [vmem:[#allocation0] sm:$0x3]
    %220 = vrot.lane.b32.xlu0 %v219, 101
    %v221 = vpop.permute.xlu0 %220
    %vm222 = vcmask 7168
    %s223 = scalar_lea.vmem %s1, 27
    %224 = vst.msk [vmem:[%s223] sm:$0x1] %vm222, %v221
    %s225 = scalar_lea.vmem %s1, 58
    %226 = vst.msk [vmem:[%s225] sm:$0x2] %vm222, %v221
    %v227 = vld [vmem:[#allocation0] sm:$0x3]
    %228 = vrot.lane.b32.xlu0 %v227, 100
    %v229 = vpop.permute.xlu0 %228
    %vm230 = vcmask 7168
    %s231 = scalar_lea.vmem %s1, 28
    %232 = vst.msk [vmem:[%s231] sm:$0x1] %vm230, %v229
    %s233 = scalar_lea.vmem %s1, 59
    %234 = vst.msk [vmem:[%s233] sm:$0x2] %vm230, %v229
    %v235 = vld [vmem:[#allocation0] sm:$0x3]
    %236 = vrot.lane.b32.xlu0 %v235, 99
    %v237 = vpop.permute.xlu0 %236
    %vm238 = vcmask 7168
    %s239 = scalar_lea.vmem %s1, 29
    %240 = vst.msk [vmem:[%s239] sm:$0x1] %vm238, %v237
    %s241 = scalar_lea.vmem %s1, 60
    %242 = vst.msk [vmem:[%s241] sm:$0x2] %vm238, %v237
    %v243 = vld [vmem:[#allocation0] sm:$0x3]
    %244 = vrot.lane.b32.xlu0 %v243, 98
    %v245 = vpop.permute.xlu0 %244
    %vm246 = vcmask 7168
    %s247 = scalar_lea.vmem %s1, 30
    %248 = vst.msk [vmem:[%s247] sm:$0x1] %vm246, %v245
    %s249 = scalar_lea.vmem %s1, 61
    %250 = vst.msk [vmem:[%s249] sm:$0x2] %vm246, %v245
    %v251 = vld [vmem:[#allocation0] sm:$0x3]
    %252 = vrot.lane.b32.xlu0 %v251, 97
    %v253 = vpop.permute.xlu0 %252
    %vm254 = vcmask 7168
    %s255 = scalar_lea.vmem %s1, 31
    %256 = vst.msk [vmem:[%s255] sm:$0x1] %vm254, %v253
    %s257 = scalar_lea.vmem %s1, 62
    %258 = vst.msk [vmem:[%s257] sm:$0x2] %vm254, %v253

</llo_original>
